<compile_context>
chip_gen: v6e
topology: v6e:2x2x1
jax: 0.10.0
libtpu: 0.0.40
codegen_flags: <defaults>
</compile_context>

<pallas_src>
import math
import functools

import jax
import jax.numpy as jnp
from jax import lax
from jax.experimental import pallas as pl
from jax.experimental.pallas import tpu as pltpu

# Flip to jnp.bfloat16 on v6e/v7x for full-rate MXU at larger model sizes
# (elementwise/softmax math stays f32 either way).
MXU_INPUT_DTYPE = jnp.float32


def _round_up(n, m):
    return ((n + m - 1) // m) * m


def _batch_tile(B, L, max_rows=512):
    """Pick a batch tile BT (divisor of B) with BT*L <= max_rows rows per grid
    step and BT*L sublane-aligned (multiple of 8) whenever the batch is split.
    Falls back to the full batch (block == full array, always layout-legal)."""
    cap = max(1, max_rows // max(L, 1))
    best = None
    for bt in range(1, min(B, cap) + 1):
        if B % bt == 0 and (bt * L) % 8 == 0:
            best = bt
    if best is None:
        best = B
    return best


def transformer_seq2seq_kernel(
    xsem_ref,   # (BT, L, D)  semantic embeddings for this batch tile
    xpos_ref,   # (L, D)      positional embeddings (shared across batch)
    qk_ref,     # (D, 2D)     fused [Q*1/sqrt(D) | K] projection weight
    w1_ref,     # (D, Pp)     fc1 weight, lane-padded (x @ W convention)
    b1_ref,     # (1, Pp)     fc1 bias, lane-padded
    w2_ref,     # (Pp, Cp)    fc2 weight, padded
    b2_ref,     # (1, Cp)     fc2 bias, padded
    out_ref,    # (BT*L, Cp)  lane-dense output logits for this batch tile
):
    BT, L, D = xsem_ref.shape
    mxu_dt = MXU_INPUT_DTYPE

    x_sem = xsem_ref[...]                               # (BT, L, D) f32
    x = x_sem + xpos_ref[...][None]                     # attention_input='both'
    x2 = x.reshape(BT * L, D)                           # flatten batch into rows

    # Fused Q|K projection: one (BT*L, D) @ (D, 2D) MXU pass.
    qk = jnp.dot(x2.astype(mxu_dt), qk_ref[...].astype(mxu_dt),
                 preferred_element_type=jnp.float32)    # (BT*L, 2D)
    qk3 = qk.reshape(BT, L, 2 * D)
    qx = qk3[..., :D]                                   # 1/sqrt(D) already folded in
    kx = qk3[..., D:]

    # scores[b] = qx[b] @ kx[b]^T, contracting the last dims (no transpose made).
    scores = lax.dot_general(
        qx.astype(mxu_dt), kx.astype(mxu_dt),
        dimension_numbers=(((2,), (2,)), ((0,), (0,))),
        preferred_element_type=jnp.float32)             # (BT, L, L)

    # Softmax over the last dim (f32 on VPU; recip on EUP slot).
    m = jnp.max(scores, axis=-1, keepdims=True)
    e = jnp.exp(scores - m)
    denom = jnp.sum(e, axis=-1, keepdims=True)
    probs = e * pl.reciprocal(denom, approx=True)       # (BT, L, L)

    # Value mix + residual: a[b] = probs[b] @ x_sem[b]; h = a + (x_sem + x_pos).
    a = lax.dot_general(
        probs.astype(mxu_dt), x_sem.astype(mxu_dt),
        dimension_numbers=(((2,), (1,)), ((0,), (0,))),
        preferred_element_type=jnp.float32)             # (BT, L, D)
    h = (a + x).reshape(BT * L, D)

    # MLP head: fc2(relu(fc1(h))), lane-padded so all stores are unmasked.
    b = jnp.dot(h.astype(mxu_dt), w1_ref[...].astype(mxu_dt),
                preferred_element_type=jnp.float32) + b1_ref[...]
    r = jnp.maximum(b, 0.0)
    out = jnp.dot(r.astype(mxu_dt), w2_ref[...].astype(mxu_dt),
                  preferred_element_type=jnp.float32) + b2_ref[...]

    out_ref[...] = out.astype(out_ref.dtype)            # (BT*L, Cp) lane-dense


def prepare_params(params):
    """One-time parameter transform (not per-call): fuse Q|K with the 1/sqrt(D)
    scale folded into Q, and lane-pad the MLP weights/biases to multiples of 128."""
    D = params["Q"].shape[0]
    P = params["W1"].shape[1]
    C = params["W2"].shape[1]
    Pp = _round_up(P, 128)
    Cp = _round_up(C, 128)
    scale = 1.0 / math.sqrt(D)

    qk = jnp.concatenate([params["Q"] * scale, params["K"]], axis=1)     # (D, 2D)

    W1 = jnp.zeros((D, Pp), jnp.float32).at[:, :P].set(params["W1"])
    b1 = jnp.zeros((1, Pp), jnp.float32).at[:, :P].set(params["b1"])
    W2 = jnp.zeros((Pp, Cp), jnp.float32).at[:P, :C].set(params["W2"])
    b2 = jnp.zeros((1, Cp), jnp.float32).at[:, :C].set(params["b2"])

    return {
        "sem_emb": params["sem_emb"],
        "pos_emb": params["pos_emb"],
        "QK": qk, "W1": W1, "b1": b1, "W2": W2, "b2": b2,
        "n_classes": C,
    }


@functools.partial(jax.jit, static_argnames=("n_classes",))
def _forward_impl(tokens, sem_emb, pos_emb, QK, W1, b1, W2, b2, *, n_classes):
    B, L = tokens.shape
    D = sem_emb.shape[1]
    Pp = W1.shape[1]
    Cp = W2.shape[1]

    # nn.Embedding lookup (pure gather) kept as plain-JAX glue in the same jit.
    x_sem = jnp.take(sem_emb, tokens, axis=0)            # (B, L, D)

    BT = _batch_tile(B, L)
    nbt = B // BT

    out_padded = pl.pallas_call(
        transformer_seq2seq_kernel,
        out_shape=jax.ShapeDtypeStruct((B * L, Cp), jnp.float32),
        grid_spec=pltpu.PrefetchScalarGridSpec(
            num_scalar_prefetch=0,
            grid=(nbt,),
            in_specs=[
                pl.BlockSpec((BT, L, D), lambda i: (i, 0, 0)),   # x_sem (batch tile)
                pl.BlockSpec((L, D), lambda i: (0, 0)),          # x_pos (shared)
                pl.BlockSpec((D, 2 * D), lambda i: (0, 0)),      # fused Q|K
                pl.BlockSpec((D, Pp), lambda i: (0, 0)),         # W1 (padded)
                pl.BlockSpec((1, Pp), lambda i: (0, 0)),         # b1 (padded)
                pl.BlockSpec((Pp, Cp), lambda i: (0, 0)),        # W2 (padded)
                pl.BlockSpec((1, Cp), lambda i: (0, 0)),         # b2 (padded)
            ],
            out_specs=pl.BlockSpec((BT * L, Cp), lambda i: (i, 0)),  # lane-dense
        ),
        compiler_params=pltpu.CompilerParams(
            dimension_semantics=("parallel",)),
    )(x_sem, pos_emb, QK, W1, b1, W2, b2)

    return out_padded[:, :n_classes].reshape(B, L, n_classes)


def transformer_seq2seq_forward(tokens, prepared):
    """tokens: (B, L) int32. Returns (B, L, n_classes) float32 logits."""
    return _forward_impl(
        tokens,
        prepared["sem_emb"], prepared["pos_emb"], prepared["QK"],
        prepared["W1"], prepared["b1"], prepared["W2"], prepared["b2"],
        n_classes=prepared["n_classes"])


def _reference_forward(tokens, params):
    """Pure-JAX reference mirroring the PyTorch forward (for sanity check)."""
    x_sem = jnp.take(params["sem_emb"], tokens, axis=0)               # (B, L, D)
    x_pos = jnp.broadcast_to(params["pos_emb"][None], x_sem.shape)    # (B, L, D)
    D = x_sem.shape[-1]
    x = x_sem + x_pos
    Qx = x @ params["Q"]
    Kx = x @ params["K"]
    scores = jnp.einsum("bld,bmd->blm", Qx, Kx) / math.sqrt(D)
    probs = jax.nn.softmax(scores, axis=-1)
    a = jnp.einsum("blm,bmd->bld", probs, x_sem)
    h = a + x_sem + x_pos
    b = h @ params["W1"] + params["b1"]
    return jax.nn.relu(b) @ params["W2"] + params["b2"]


if __name__ == "__main__":
    # Module hyperparameters (small, consistent with the forward pass):
    T = 10          # vocab size
    D = 32          # model_dim
    P = 64          # p (hidden width of fc1)
    C = 8           # n_classes
    L = 8           # seq_len / max positional length
    B = 2           # batch

    key = jax.random.PRNGKey(0)
    ks = jax.random.split(key, 9)

    params = {
        "sem_emb": jax.random.normal(ks[0], (T, D), jnp.float32),
        "pos_emb": jax.random.normal(ks[1], (L, D), jnp.float32),
        "Q": jax.random.normal(ks[2], (D, D), jnp.float32) / math.sqrt(D),
        "K": jax.random.normal(ks[3], (D, D), jnp.float32) / math.sqrt(D),
        "W1": jax.random.normal(ks[4], (D, P), jnp.float32) / math.sqrt(D),
        "b1": jax.random.normal(ks[5], (1, P), jnp.float32) * 0.01,
        "W2": jax.random.normal(ks[6], (P, C), jnp.float32) / math.sqrt(P),
        "b2": jax.random.normal(ks[7], (1, C), jnp.float32) * 0.01,
    }

    tokens = jax.random.randint(ks[8], (B, L), 0, T, dtype=jnp.int32)

    prepared = prepare_params(params)
    out = transformer_seq2seq_forward(tokens, prepared)
    out = jax.block_until_ready(out)

    ref = _reference_forward(tokens, params)
    assert out.shape == (B, L, C)
    # approx reciprocal in the softmax denominator -> slightly looser tolerance.
    assert jnp.allclose(out, ref, atol=1e-2, rtol=1e-2), "mismatch vs reference"

    print("KERNEL_OK")
</pallas_src>

<mosaic_0001>
module attributes {stable_mosaic.version = 11 : i64} {
  func.func @transformer_seq2seq_kernel(%arg0: i32, %arg1: memref<2x8x32xf32, #tpu.memory_space<vmem>>, %arg2: memref<8x32xf32, #tpu.memory_space<vmem>>, %arg3: memref<32x64xf32, #tpu.memory_space<vmem>>, %arg4: memref<32x128xf32, #tpu.memory_space<vmem>>, %arg5: memref<1x128xf32, #tpu.memory_space<vmem>>, %arg6: memref<128x128xf32, #tpu.memory_space<vmem>>, %arg7: memref<1x128xf32, #tpu.memory_space<vmem>>, %arg8: memref<16x128xf32, #tpu.memory_space<vmem>>) attributes {dimension_semantics = [#tpu.dimension_semantics<parallel>], iteration_bounds = array<i64: 1>, scalar_prefetch = 0 : i64, scratch_operands = 0 : i64, tpu.core_type = #tpu.core_type<tc>, window_params = [{transform_indices = @transform_0, window_bounds = array<i64: 2, 8, 32>}, {pipeline_mode = #tpu.pipeline_mode<synchronous>, transform_indices = @transform_1, window_bounds = array<i64: 8, 32>}, {pipeline_mode = #tpu.pipeline_mode<synchronous>, transform_indices = @transform_2, window_bounds = array<i64: 32, 64>}, {pipeline_mode = #tpu.pipeline_mode<synchronous>, transform_indices = @transform_3, window_bounds = array<i64: 32, 128>}, {pipeline_mode = #tpu.pipeline_mode<synchronous>, transform_indices = @transform_4, window_bounds = array<i64: 1, 128>}, {pipeline_mode = #tpu.pipeline_mode<synchronous>, transform_indices = @transform_5, window_bounds = array<i64: 128, 128>}, {pipeline_mode = #tpu.pipeline_mode<synchronous>, transform_indices = @transform_6, window_bounds = array<i64: 1, 128>}, {transform_indices = @transform_7, window_bounds = array<i64: 16, 128>}]} {
    %c0 = arith.constant 0 : index
    %c0_0 = arith.constant 0 : index
    %c0_1 = arith.constant 0 : index
    %0 = vector.load %arg1[%c0, %c0_0, %c0_1] : memref<2x8x32xf32, #tpu.memory_space<vmem>>, vector<2x8x32xf32>
    %c0_2 = arith.constant 0 : index
    %c0_3 = arith.constant 0 : index
    %1 = vector.load %arg2[%c0_2, %c0_3] : memref<8x32xf32, #tpu.memory_space<vmem>>, vector<8x32xf32>
    %2 = vector.shape_cast %1 : vector<8x32xf32> to vector<1x8x32xf32>
    %3 = vector.broadcast %2 : vector<1x8x32xf32> to vector<2x8x32xf32>
    %4 = arith.addf %0, %3 : vector<2x8x32xf32>
    %5 = vector.shape_cast %4 : vector<2x8x32xf32> to vector<16x32xf32>
    %c0_4 = arith.constant 0 : index
    %c0_5 = arith.constant 0 : index
    %6 = vector.load %arg3[%c0_4, %c0_5] : memref<32x64xf32, #tpu.memory_space<vmem>>, vector<32x64xf32>
    %cst = arith.constant dense<0.000000e+00> : vector<16x64xf32>
    %7 = tpu.matmul %5, %6, %cst {dimension_numbers = #tpu.dot_dimension_numbers<[1], [0], [0], [1], [0, 0, 1, 1], [], []>} : vector<16x32xf32>, vector<32x64xf32>, vector<16x64xf32> -> vector<16x64xf32>
    %8 = vector.shape_cast %7 : vector<16x64xf32> to vector<2x8x64xf32>
    %9 = vector.extract_strided_slice %8 {offsets = [0, 0, 0], sizes = [2, 8, 32], strides = [1, 1, 1]} : vector<2x8x64xf32> to vector<2x8x32xf32>
    %10 = vector.extract_strided_slice %8 {offsets = [0, 0, 32], sizes = [2, 8, 32], strides = [1, 1, 1]} : vector<2x8x64xf32> to vector<2x8x32xf32>
    %cst_6 = arith.constant dense<0.000000e+00> : vector<2x8x8xf32>
    %11 = tpu.matmul %9, %10, %cst_6 {dimension_numbers = #tpu.dot_dimension_numbers<[2], [2], [1], [1], [0, 0, 0, 1, 1, 1], [0], [0]>} : vector<2x8x32xf32>, vector<2x8x32xf32>, vector<2x8x8xf32> -> vector<2x8x8xf32>
    %cst_7 = arith.constant dense<0xFF800000> : vector<2x8xf32>
    %12 = vector.multi_reduction <maximumf>, %11, %cst_7 [2] : vector<2x8x8xf32> to vector<2x8xf32>
    %13 = vector.shape_cast %12 : vector<2x8xf32> to vector<2x8x1xf32>
    %14 = vector.broadcast %13 : vector<2x8x1xf32> to vector<2x8x8xf32>
    %15 = arith.subf %11, %14 : vector<2x8x8xf32>
    %16 = math.exp %15 : vector<2x8x8xf32>
    %cst_8 = arith.constant dense<0.000000e+00> : vector<2x8xf32>
    %17 = vector.multi_reduction <add>, %16, %cst_8 [2] : vector<2x8x8xf32> to vector<2x8xf32>
    %18 = vector.shape_cast %17 : vector<2x8xf32> to vector<2x8x1xf32>
    %19 = tpu.reciprocal %18 {approx = true} : vector<2x8x1xf32> -> vector<2x8x1xf32>
    %20 = vector.broadcast %19 : vector<2x8x1xf32> to vector<2x8x8xf32>
    %21 = arith.mulf %16, %20 : vector<2x8x8xf32>
    %cst_9 = arith.constant dense<0.000000e+00> : vector<2x8x32xf32>
    %22 = tpu.matmul %21, %0, %cst_9 {dimension_numbers = #tpu.dot_dimension_numbers<[2], [1], [1], [2], [0, 0, 0, 1, 1, 2], [0], [0]>} : vector<2x8x8xf32>, vector<2x8x32xf32>, vector<2x8x32xf32> -> vector<2x8x32xf32>
    %23 = arith.addf %22, %4 : vector<2x8x32xf32>
    %24 = vector.shape_cast %23 : vector<2x8x32xf32> to vector<16x32xf32>
    %c0_10 = arith.constant 0 : index
    %c0_11 = arith.constant 0 : index
    %25 = vector.load %arg4[%c0_10, %c0_11] : memref<32x128xf32, #tpu.memory_space<vmem>>, vector<32x128xf32>
    %cst_12 = arith.constant dense<0.000000e+00> : vector<16x128xf32>
    %26 = tpu.matmul %24, %25, %cst_12 {dimension_numbers = #tpu.dot_dimension_numbers<[1], [0], [0], [1], [0, 0, 1, 1], [], []>} : vector<16x32xf32>, vector<32x128xf32>, vector<16x128xf32> -> vector<16x128xf32>
    %c0_13 = arith.constant 0 : index
    %c0_14 = arith.constant 0 : index
    %27 = vector.load %arg5[%c0_13, %c0_14] : memref<1x128xf32, #tpu.memory_space<vmem>>, vector<1x128xf32>
    %28 = vector.broadcast %27 : vector<1x128xf32> to vector<16x128xf32>
    %29 = arith.addf %26, %28 : vector<16x128xf32>
    %cst_15 = arith.constant 0.000000e+00 : f32
    %30 = vector.broadcast %cst_15 : f32 to vector<16x128xf32>
    %31 = arith.maximumf %29, %30 : vector<16x128xf32>
    %c0_16 = arith.constant 0 : index
    %c0_17 = arith.constant 0 : index
    %32 = vector.load %arg6[%c0_16, %c0_17] : memref<128x128xf32, #tpu.memory_space<vmem>>, vector<128x128xf32>
    %cst_18 = arith.constant dense<0.000000e+00> : vector<16x128xf32>
    %33 = tpu.matmul %31, %32, %cst_18 {dimension_numbers = #tpu.dot_dimension_numbers<[1], [0], [0], [1], [0, 0, 1, 1], [], []>} : vector<16x128xf32>, vector<128x128xf32>, vector<16x128xf32> -> vector<16x128xf32>
    %c0_19 = arith.constant 0 : index
    %c0_20 = arith.constant 0 : index
    %34 = vector.load %arg7[%c0_19, %c0_20] : memref<1x128xf32, #tpu.memory_space<vmem>>, vector<1x128xf32>
    %35 = vector.broadcast %34 : vector<1x128xf32> to vector<16x128xf32>
    %36 = arith.addf %33, %35 : vector<16x128xf32>
    %c0_21 = arith.constant 0 : index
    %c0_22 = arith.constant 0 : index
    %37 = vector.load %arg8[%c0_21, %c0_22] : memref<16x128xf32, #tpu.memory_space<vmem>>, vector<16x128xf32>
    tpu.vector_store %arg8[%c0_21, %c0_22], %36 {strides = array<i32>} : memref<16x128xf32, #tpu.memory_space<vmem>>, vector<16x128xf32>,
    return
  }
  func.func @transform_0(%arg0: i32) -> (i32, i32, i32) {
    %c0_i32 = arith.constant 0 : i32
    %c0_i32_0 = arith.constant 0 : i32
    %c0_i32_1 = arith.constant 0 : i32
    return %arg0, %c0_i32, %c0_i32_0 : i32, i32, i32
  }
  func.func @transform_1(%arg0: i32) -> (i32, i32) {
    %c0_i32 = arith.constant 0 : i32
    %c0_i32_0 = arith.constant 0 : i32
    %c0_i32_1 = arith.constant 0 : i32
    return %c0_i32, %c0_i32_0 : i32, i32
  }
  func.func @transform_2(%arg0: i32) -> (i32, i32) {
    %c0_i32 = arith.constant 0 : i32
    %c0_i32_0 = arith.constant 0 : i32
    %c0_i32_1 = arith.constant 0 : i32
    return %c0_i32, %c0_i32_0 : i32, i32
  }
  func.func @transform_3(%arg0: i32) -> (i32, i32) {
    %c0_i32 = arith.constant 0 : i32
    %c0_i32_0 = arith.constant 0 : i32
    %c0_i32_1 = arith.constant 0 : i32
    return %c0_i32, %c0_i32_0 : i32, i32
  }
  func.func @transform_4(%arg0: i32) -> (i32, i32) {
    %c0_i32 = arith.constant 0 : i32
    %c0_i32_0 = arith.constant 0 : i32
    %c0_i32_1 = arith.constant 0 : i32
    return %c0_i32, %c0_i32_0 : i32, i32
  }
  func.func @transform_5(%arg0: i32) -> (i32, i32) {
    %c0_i32 = arith.constant 0 : i32
    %c0_i32_0 = arith.constant 0 : i32
    %c0_i32_1 = arith.constant 0 : i32
    return %c0_i32, %c0_i32_0 : i32, i32
  }
  func.func @transform_6(%arg0: i32) -> (i32, i32) {
    %c0_i32 = arith.constant 0 : i32
    %c0_i32_0 = arith.constant 0 : i32
    %c0_i32_1 = arith.constant 0 : i32
    return %c0_i32, %c0_i32_0 : i32, i32
  }
  func.func @transform_7(%arg0: i32) -> (i32, i32) {
    %c0_i32 = arith.constant 0 : i32
    %c0_i32_0 = arith.constant 0 : i32
    return %arg0, %c0_i32 : i32, i32
  }
}

</mosaic_0001>

<llo_original>
// kernel: _forward_impl.1
$region0: #{_forward_impl.1}
  #allocation0 [shape = 'u32[]', space=smem, size = 0x4, offset = 0x4, fixed_abs, tag = 'smem constant byte address 0x4 - core index']
  #allocation1 [shape = 'u32[144,128]{1,0:T(1,128)}', space=vmem, size = 0x12000, scoped, tag = 'internal scratch']
  %s0 = inlined_call_operand.vmem [shape: f32[2,8,32], index: 0, kind: input, shape index: {}]
  %s1 = inlined_call_operand.vmem [shape: f32[8,32], index: 1, kind: input, shape index: {}]
  %s2 = inlined_call_operand.vmem [shape: f32[32,64], index: 2, kind: input, shape index: {}]
  %s3 = inlined_call_operand.vmem [shape: f32[32,128], index: 3, kind: input, shape index: {}]
  %s4 = inlined_call_operand.vmem [shape: f32[1,128], index: 4, kind: input, shape index: {}]
  %s5 = inlined_call_operand.vmem [shape: f32[128,128], index: 5, kind: input, shape index: {}]
  %s6 = inlined_call_operand.vmem [shape: f32[1,128], index: 6, kind: input, shape index: {}]
  %s7 = inlined_call_operand.vmem [shape: f32[16,128], index: 7, kind: output, shape index: {}]
  %s8 = sld [smem:[#allocation0]]
  $region38: #{_forward_impl.1} parent=0
    _
  %s10 = ssub.s32 1, %s8
  %s11 = scalar_select 0, %s10, %s8
  // Predicated region
  $region2: #{_forward_impl.1} parent=0 // pred_check
    _
  $region3: #{_forward_impl.1} parent=0 // pred_check_branch
    %13 = sbr.rel (0) target = $region5
  $region4: #{_forward_impl.1} parent=0 // pred_region
    _
  $region5: #{_forward_impl.1} parent=0 // pred_fallthru
    _
  // Predicated region
  $region6: #{_forward_impl.1} parent=0 // pred_check
    _
  $region7: #{_forward_impl.1} parent=0 // pred_check_branch
    %15 = sbr.rel (0) target = $region9
  $region8: #{_forward_impl.1} parent=0 // pred_region
    _
  $region9: #{_forward_impl.1} parent=0 // pred_fallthru
    _
  // Predicated region
  $region10: #{_forward_impl.1} parent=0 // pred_check
    _
  $region11: #{_forward_impl.1} parent=0 // pred_check_branch
    %17 = sbr.rel (0) target = $region13
  $region12: #{_forward_impl.1} parent=0 // pred_region
    _
  $region13: #{_forward_impl.1} parent=0 // pred_fallthru
    _
  // Predicated region
  $region14: #{_forward_impl.1} parent=0 // pred_check
    _
  $region15: #{_forward_impl.1} parent=0 // pred_check_branch
    %19 = sbr.rel (0) target = $region17
  $region16: #{_forward_impl.1} parent=0 // pred_region
    _
  $region17: #{_forward_impl.1} parent=0 // pred_fallthru
    _
  // Predicated region
  $region18: #{_forward_impl.1} parent=0 // pred_check
    _
  $region19: #{_forward_impl.1} parent=0 // pred_check_branch
    %21 = sbr.rel (0) target = $region21
  $region20: #{_forward_impl.1} parent=0 // pred_region
    _
  $region21: #{_forward_impl.1} parent=0 // pred_fallthru
    _
  // Predicated region
  $region22: #{_forward_impl.1} parent=0 // pred_check
    _
  $region23: #{_forward_impl.1} parent=0 // pred_check_branch
    %23 = sbr.rel (0) target = $region25
  $region24: #{_forward_impl.1} parent=0 // pred_region
    _
  $region25: #{_forward_impl.1} parent=0 // pred_fallthru
    _
  // Predicated region
  $region26: #{_forward_impl.1} parent=0 // pred_check
    _
  $region27: #{_forward_impl.1} parent=0 // pred_check_branch
    %25 = sbr.rel (0) target = $region29
  $region28: #{_forward_impl.1} parent=0 // pred_region
    _
  $region29: #{_forward_impl.1} parent=0 // pred_fallthru
    _
  %v26 = vld [vmem:[%s0] sm:$0xff]
  %v27 = vld [vmem:[%s0 + $0x8] sm:$0xff]
  %v28 = vld [vmem:[%s1] sm:$0xff]
  %v29 = vadd.f32 %v26, %v28
  %v30 = vadd.f32 %v27, %v28
  %v31 = vld [vmem:[%s2] sm:$0xff]
  %v32 = vld [vmem:[%s2 + $0x8] sm:$0xff]
  %v33 = vld [vmem:[%s2 + $0x10] sm:$0xff]
  %v34 = vld [vmem:[%s2 + $0x18] sm:$0xff]
  %vm35 = vcmask 261120
  %v37 = vsel %vm35, %v29, 0
  %v40 = vsel %vm35, %v30, 0
  %42 = vmatprep.subr.mxu0 0.0
  %43 = vmatpush1.msra.mxu0 0.0
  %44 = vmatprep.subr.mxu0 0.0
  %45 = vmatpush1.msra.mxu0 0.0
  %46 = vmatprep.subr.mxu0 0.0
  %47 = vmatpush1.msra.mxu0 0.0
  %48 = vmatprep.subr.mxu0 0.0
  %49 = vmatpush1.msra.mxu0 0.0
  %50 = vmatprep.subr.mxu0 0.0
  %51 = vmatpush1.msra.mxu0 0.0
  %52 = vmatprep.subr.mxu0 0.0
  %53 = vmatpush1.msra.mxu0 0.0
  %54 = vmatprep.subr.mxu0 0.0
  %55 = vmatpush1.msra.mxu0 0.0
  %56 = vmatprep.subr.mxu0 0.0
  %57 = vmatpush1.msra.mxu0 0.0
  %58 = vmatprep.subr.mxu0 0.0
  %59 = vmatpush1.msra.mxu0 0.0
  %60 = vmatprep.subr.mxu0 0.0
  %61 = vmatpush1.msra.mxu0 0.0
  %62 = vmatprep.subr.mxu0 0.0
  %63 = vmatpush1.msra.mxu0 0.0
  %64 = vmatprep.subr.mxu0 0.0
  %65 = vmatpush1.msra.mxu0 0.0
  %66 = vmatprep.subr.mxu0 0.0
  %67 = vmatpush1.msra.mxu0 %v34
  %68 = vmatprep.subr.mxu0 0.0
  %69 = vmatpush1.msra.mxu0 %v33
  %70 = vmatprep.subr.mxu0 0.0
  %71 = vmatpush1.msra.mxu0 %v32
  %72 = vmatprep.subr.mxu0 0.0
  %73 = vmatpush1.msra.mxu0 %v31
  %74 = vmatprep.subr.mxu0 0.0
  %75 = vmatpush2.msra.mxu0 0.0
  %76 = vmatprep.subr.mxu0 0.0
  %77 = vmatpush2.msra.mxu0 0.0
  %78 = vmatprep.subr.mxu0 0.0
  %79 = vmatpush2.msra.mxu0 0.0
  %80 = vmatprep.subr.mxu0 0.0
  %81 = vmatpush2.msra.mxu0 0.0
  %82 = vmatprep.subr.mxu0 0.0
  %83 = vmatpush2.msra.mxu0 0.0
  %84 = vmatprep.subr.mxu0 0.0
  %85 = vmatpush2.msra.mxu0 0.0
  %86 = vmatprep.subr.mxu0 0.0
  %87 = vmatpush2.msra.mxu0 0.0
  %88 = vmatprep.subr.mxu0 0.0
  %89 = vmatpush2.msra.mxu0 0.0
  %90 = vmatprep.subr.mxu0 0.0
  %91 = vmatpush2.msra.mxu0 0.0
  %92 = vmatprep.subr.mxu0 0.0
  %93 = vmatpush2.msra.mxu0 0.0
  %94 = vmatprep.subr.mxu0 0.0
  %95 = vmatpush2.msra.mxu0 0.0
  %96 = vmatprep.subr.mxu0 0.0
  %97 = vmatpush2.msra.mxu0 0.0
  %98 = vmatprep.subr.mxu0 0.0
  %99 = vmatpush2.msra.mxu0 0.0
  %100 = vmatprep.subr.mxu0 0.0
  %101 = vmatpush2.msra.mxu0 0.0
  %102 = vmatprep.subr.mxu0 0.0
  %103 = vmatpush2.msra.mxu0 0.0
  %104 = vmatprep.subr.mxu0 0.0
  %105 = vmatpush2.msra.mxu0 0.0
  %106 = vmatprep.mubr.f32.mxu0 0.0
  %107 = vmatmul.mubr.f32.gmra.mxu0 %v37
  %v108 = vpop.f32.mrf.mxu0
  %v109 = vadd.f32 0.0, %v108
  %v110 = vpop.f32.mrf.mxu0
  %111 = vmatprep.mubr.f32.mxu0 0.0
  %112 = vmatmul.mubr.f32.gmra.mxu0 %v40
  %v113 = vpop.f32.mrf.mxu0
  %v114 = vadd.f32 0.0, %v113
  %v115 = vpop.f32.mrf.mxu0
  %116 = vdwg.mxu0
  %118 = vrot.lane.b32.xlu0 %v109, 96
  %v119 = vpop.permute.xlu0 %118
  %v120 = vsel %vm35, %v109, 0
  %v122 = vsel %vm35, %v119, 0
  %124 = vmatprep.subr.mxu0 0.0
  %125 = vmatpush1.xpose.msra.mxu0 0.0
  %126 = vmatprep.subr.mxu0 0.0
  %127 = vmatpush1.xpose.msra.mxu0 0.0
  %128 = vmatprep.subr.mxu0 0.0
  %129 = vmatpush1.xpose.msra.mxu0 0.0
  %130 = vmatprep.subr.mxu0 0.0
  %131 = vmatpush1.xpose.msra.mxu0 0.0
  %132 = vmatprep.subr.mxu0 0.0
  %133 = vmatpush1.xpose.msra.mxu0 0.0
  %134 = vmatprep.subr.mxu0 0.0
  %135 = vmatpush1.xpose.msra.mxu0 0.0
  %136 = vmatprep.subr.mxu0 0.0
  %137 = vmatpush1.xpose.msra.mxu0 0.0
  %138 = vmatprep.subr.mxu0 0.0
  %139 = vmatpush1.xpose.msra.mxu0 0.0
  %140 = vmatprep.subr.mxu0 0.0
  %141 = vmatpush1.xpose.msra.mxu0 0.0
  %142 = vmatprep.subr.mxu0 0.0
  %143 = vmatpush1.xpose.msra.mxu0 0.0
  %144 = vmatprep.subr.mxu0 0.0
  %145 = vmatpush1.xpose.msra.mxu0 0.0
  %146 = vmatprep.subr.mxu0 0.0
  %147 = vmatpush1.xpose.msra.mxu0 0.0
  %148 = vmatprep.subr.mxu0 0.0
  %149 = vmatpush1.xpose.msra.mxu0 0.0
  %150 = vmatprep.subr.mxu0 0.0
  %151 = vmatpush1.xpose.msra.mxu0 0.0
  %152 = vmatprep.subr.mxu0 0.0
  %153 = vmatpush1.xpose.msra.mxu0 0.0
  %154 = vmatprep.subr.mxu0 0.0
  %155 = vmatpush1.xpose.msra.mxu0 %v122
  %156 = vmatprep.subr.mxu0 0.0
  %157 = vmatpush2.xpose.msra.mxu0 0.0
  %158 = vmatprep.subr.mxu0 0.0
  %159 = vmatpush2.xpose.msra.mxu0 0.0
  %160 = vmatprep.subr.mxu0 0.0
  %161 = vmatpush2.xpose.msra.mxu0 0.0
  %162 = vmatprep.subr.mxu0 0.0
  %163 = vmatpush2.xpose.msra.mxu0 0.0
  %164 = vmatprep.subr.mxu0 0.0
  %165 = vmatpush2.xpose.msra.mxu0 0.0
  %166 = vmatprep.subr.mxu0 0.0
  %167 = vmatpush2.xpose.msra.mxu0 0.0
  %168 = vmatprep.subr.mxu0 0.0
  %169 = vmatpush2.xpose.msra.mxu0 0.0
  %170 = vmatprep.subr.mxu0 0.0
  %171 = vmatpush2.xpose.msra.mxu0 0.0
  %172 = vmatprep.subr.mxu0 0.0
  %173 = vmatpush2.xpose.msra.mxu0 0.0
  %174 = vmatprep.subr.mxu0 0.0
  %175 = vmatpush2.xpose.msra.mxu0 0.0
  %176 = vmatprep.subr.mxu0 0.0
  %177 = vmatpush2.xpose.msra.mxu0 0.0
  %178 = vmatprep.subr.mxu0 0.0
  %179 = vmatpush2.xpose.msra.mxu0 0.0
  %180 = vmatprep.subr.mxu0 0.0
  %181 = vmatpush2.xpose.msra.mxu0 0.0
  %182 = vmatprep.subr.mxu0 0.0
  %183 = vmatpush2.xpose.msra.mxu0 0.0
  %184 = vmatprep.subr.mxu0 0.0
  %185 = vmatpush2.xpose.msra.mxu0 0.0
  %186 = vmatprep.subr.mxu0 0.0
  %187 = vmatpush2.xpose.msra.mxu0 0.0
  %188 = vmatprep.mubr.f32.mxu0 0.0
  %189 = vmatmul.mubr.f32.gmra.mxu0 %v120
  %v190 = vpop.f32.mrf.mxu0
  %v191 = vadd.f32 0.0, %v190
  %v192 = vpop.f32.mrf.mxu0
  %193 = vdwg.mxu0
  %195 = vrot.lane.b32.xlu0 %v114, 96
  %v196 = vpop.permute.xlu0 %195
  %v197 = vsel %vm35, %v114, 0
  %v199 = vsel %vm35, %v196, 0
  %201 = vmatprep.subr.mxu0 0.0
  %202 = vmatpush1.xpose.msra.mxu0 0.0
  %203 = vmatprep.subr.mxu0 0.0
  %204 = vmatpush1.xpose.msra.mxu0 0.0
  %205 = vmatprep.subr.mxu0 0.0
  %206 = vmatpush1.xpose.msra.mxu0 0.0
  %207 = vmatprep.subr.mxu0 0.0
  %208 = vmatpush1.xpose.msra.mxu0 0.0
  %209 = vmatprep.subr.mxu0 0.0
  %210 = vmatpush1.xpose.msra.mxu0 0.0
  %211 = vmatprep.subr.mxu0 0.0
  %212 = vmatpush1.xpose.msra.mxu0 0.0
  %213 = vmatprep.subr.mxu0 0.0
  %214 = vmatpush1.xpose.msra.mxu0 0.0
  %215 = vmatprep.subr.mxu0 0.0
  %216 = vmatpush1.xpose.msra.mxu0 0.0
  %217 = vmatprep.subr.mxu0 0.0
  %218 = vmatpush1.xpose.msra.mxu0 0.0
  %219 = vmatprep.subr.mxu0 0.0
  %220 = vmatpush1.xpose.msra.mxu0 0.0
  %221 = vmatprep.subr.mxu0 0.0
  %222 = vmatpush1.xpose.msra.mxu0 0.0
  %223 = vmatprep.subr.mxu0 0.0
  %224 = vmatpush1.xpose.msra.mxu0 0.0
  %225 = vmatprep.subr.mxu0 0.0
  %226 = vmatpush1.xpose.msra.mxu0 0.0
  %227 = vmatprep.subr.mxu0 0.0
  %228 = vmatpush1.xpose.msra.mxu0 0.0
  %229 = vmatprep.subr.mxu0 0.0
  %230 = vmatpush1.xpose.msra.mxu0 0.0
  %231 = vmatprep.subr.mxu0 0.0
  %232 = vmatpush1.xpose.msra.mxu0 %v199
  %233 = vmatprep.subr.mxu0 0.0
  %234 = vmatpush2.xpose.msra.mxu0 0.0
  %235 = vmatprep.subr.mxu0 0.0
  %236 = vmatpush2.xpose.msra.mxu0 0.0
  %237 = vmatprep.subr.mxu0 0.0
  %238 = vmatpush2.xpose.msra.mxu0 0.0
  %239 = vmatprep.subr.mxu0 0.0
  %240 = vmatpush2.xpose.msra.mxu0 0.0
  %241 = vmatprep.subr.mxu0 0.0
  %242 = vmatpush2.xpose.msra.mxu0 0.0
  %243 = vmatprep.subr.mxu0 0.0
  %244 = vmatpush2.xpose.msra.mxu0 0.0
  %245 = vmatprep.subr.mxu0 0.0
  %246 = vmatpush2.xpose.msra.mxu0 0.0
  %247 = vmatprep.subr.mxu0 0.0
  %248 = vmatpush2.xpose.msra.mxu0 0.0
  %249 = vmatprep.subr.mxu0 0.0
  %250 = vmatpush2.xpose.msra.mxu0 0.0
  %251 = vmatprep.subr.mxu0 0.0
  %252 = vmatpush2.xpose.msra.mxu0 0.0
  %253 = vmatprep.subr.mxu0 0.0
  %254 = vmatpush2.xpose.msra.mxu0 0.0
  %255 = vmatprep.subr.mxu0 0.0
  %256 = vmatpush2.xpose.msra.mxu0 0.0
  %257 = vmatprep.subr.mxu0 0.0
  %258 = vmatpush2.xpose.msra.mxu0 0.0
  %259 = vmatprep.subr.mxu0 0.0
  %260 = vmatpush2.xpose.msra.mxu0 0.0
  %261 = vmatprep.subr.mxu0 0.0
  %262 = vmatpush2.xpose.msra.mxu0 0.0
  %263 = vmatprep.subr.mxu0 0.0
  %264 = vmatpush2.xpose.msra.mxu0 0.0
  %265 = vmatprep.mubr.f32.mxu0 0.0
  %266 = vmatmul.mubr.f32.gmra.mxu0 %v197
  %v267 = vpop.f32.mrf.mxu0
  %v268 = vadd.f32 0.0, %v267
  %v269 = vpop.f32.mrf.mxu0
  %270 = vdwg.mxu0
  %vm271 = vcmask 64512
  %v272 = vsel %vm271, %v191, -inf
  %273 = vmax.xlane.f32.xlu0 %v272
  %v274 = vpop.xlane.xlu0 %273
  %v275 = vsel %vm271, %v268, -inf
  %276 = vmax.xlane.f32.xlu0 %v275
  %v277 = vpop.xlane.xlu0 %276
  %v278 = vsub.f32 %v191, %v274
  %v279 = vsub.f32 %v268, %v277
  %v280 = vmul.f32 %v278, 1.442695
  %v281 = vpow.pop %v280
  %v282 = vmul.f32 %v279, 1.442695
  %v283 = vpow.pop %v282
  %v284 = vsel %vm271, %v281, 0.0
  %285 = vadd.xlane.f32.xlu0 %v284
  %v286 = vpop.xlane.xlu0 %285
  %v287 = vsel %vm271, %v283, 0.0
  %288 = vadd.xlane.f32.xlu0 %v287
  %v289 = vpop.xlane.xlu0 %288
  %v290 = vrcp.pop %v286
  %v291 = vrcp.pop %v289
  %v292 = vmul.f32 %v281, %v290
  %v293 = vmul.f32 %v283, %v291
  %v295 = vsel %vm271, %v292, 0
  %297 = vmatprep.subr.mxu0 0.0
  %298 = vmatpush1.msra.mxu0 0.0
  %299 = vmatprep.subr.mxu0 0.0
  %300 = vmatpush1.msra.mxu0 0.0
  %301 = vmatprep.subr.mxu0 0.0
  %302 = vmatpush1.msra.mxu0 0.0
  %303 = vmatprep.subr.mxu0 0.0
  %304 = vmatpush1.msra.mxu0 0.0
  %305 = vmatprep.subr.mxu0 0.0
  %306 = vmatpush1.msra.mxu0 0.0
  %307 = vmatprep.subr.mxu0 0.0
  %308 = vmatpush1.msra.mxu0 0.0
  %309 = vmatprep.subr.mxu0 0.0
  %310 = vmatpush1.msra.mxu0 0.0
  %311 = vmatprep.subr.mxu0 0.0
  %312 = vmatpush1.msra.mxu0 0.0
  %313 = vmatprep.subr.mxu0 0.0
  %314 = vmatpush1.msra.mxu0 0.0
  %315 = vmatprep.subr.mxu0 0.0
  %316 = vmatpush1.msra.mxu0 0.0
  %317 = vmatprep.subr.mxu0 0.0
  %318 = vmatpush1.msra.mxu0 0.0
  %319 = vmatprep.subr.mxu0 0.0
  %320 = vmatpush1.msra.mxu0 0.0
  %321 = vmatprep.subr.mxu0 0.0
  %322 = vmatpush1.msra.mxu0 0.0
  %323 = vmatprep.subr.mxu0 0.0
  %324 = vmatpush1.msra.mxu0 0.0
  %325 = vmatprep.subr.mxu0 0.0
  %326 = vmatpush1.msra.mxu0 0.0
  %327 = vmatprep.subr.mxu0 0.0
  %328 = vmatpush1.msra.mxu0 %v26
  %329 = vmatprep.subr.mxu0 0.0
  %330 = vmatpush2.msra.mxu0 0.0
  %331 = vmatprep.subr.mxu0 0.0
  %332 = vmatpush2.msra.mxu0 0.0
  %333 = vmatprep.subr.mxu0 0.0
  %334 = vmatpush2.msra.mxu0 0.0
  %335 = vmatprep.subr.mxu0 0.0
  %336 = vmatpush2.msra.mxu0 0.0
  %337 = vmatprep.subr.mxu0 0.0
  %338 = vmatpush2.msra.mxu0 0.0
  %339 = vmatprep.subr.mxu0 0.0
  %340 = vmatpush2.msra.mxu0 0.0
  %341 = vmatprep.subr.mxu0 0.0
  %342 = vmatpush2.msra.mxu0 0.0
  %343 = vmatprep.subr.mxu0 0.0
  %344 = vmatpush2.msra.mxu0 0.0
  %345 = vmatprep.subr.mxu0 0.0
  %346 = vmatpush2.msra.mxu0 0.0
  %347 = vmatprep.subr.mxu0 0.0
  %348 = vmatpush2.msra.mxu0 0.0
  %349 = vmatprep.subr.mxu0 0.0
  %350 = vmatpush2.msra.mxu0 0.0
  %351 = vmatprep.subr.mxu0 0.0
  %352 = vmatpush2.msra.mxu0 0.0
  %353 = vmatprep.subr.mxu0 0.0
  %354 = vmatpush2.msra.mxu0 0.0
  %355 = vmatprep.subr.mxu0 0.0
  %356 = vmatpush2.msra.mxu0 0.0
  %357 = vmatprep.subr.mxu0 0.0
  %358 = vmatpush2.msra.mxu0 0.0
  %359 = vmatprep.subr.mxu0 0.0
  %360 = vmatpush2.msra.mxu0 0.0
  %361 = vmatprep.mubr.f32.mxu0 0.0
  %362 = vmatmul.mubr.f32.gmra.mxu0 %v295
  %v363 = vpop.f32.mrf.mxu0
  %v364 = vadd.f32 %v29, %v363
  %v365 = vpop.f32.mrf.mxu0
  %366 = vdwg.mxu0
  %v368 = vsel %vm271, %v293, 0
  %370 = vmatprep.subr.mxu0 0.0
  %371 = vmatpush1.msra.mxu0 0.0
  %372 = vmatprep.subr.mxu0 0.0
  %373 = vmatpush1.msra.mxu0 0.0
  %374 = vmatprep.subr.mxu0 0.0
  %375 = vmatpush1.msra.mxu0 0.0
  %376 = vmatprep.subr.mxu0 0.0
  %377 = vmatpush1.msra.mxu0 0.0
  %378 = vmatprep.subr.mxu0 0.0
  %379 = vmatpush1.msra.mxu0 0.0
  %380 = vmatprep.subr.mxu0 0.0
  %381 = vmatpush1.msra.mxu0 0.0
  %382 = vmatprep.subr.mxu0 0.0
  %383 = vmatpush1.msra.mxu0 0.0
  %384 = vmatprep.subr.mxu0 0.0
  %385 = vmatpush1.msra.mxu0 0.0
  %386 = vmatprep.subr.mxu0 0.0
  %387 = vmatpush1.msra.mxu0 0.0
  %388 = vmatprep.subr.mxu0 0.0
  %389 = vmatpush1.msra.mxu0 0.0
  %390 = vmatprep.subr.mxu0 0.0
  %391 = vmatpush1.msra.mxu0 0.0
  %392 = vmatprep.subr.mxu0 0.0
  %393 = vmatpush1.msra.mxu0 0.0
  %394 = vmatprep.subr.mxu0 0.0
  %395 = vmatpush1.msra.mxu0 0.0
  %396 = vmatprep.subr.mxu0 0.0
  %397 = vmatpush1.msra.mxu0 0.0
  %398 = vmatprep.subr.mxu0 0.0
  %399 = vmatpush1.msra.mxu0 0.0
  %400 = vmatprep.subr.mxu0 0.0
  %401 = vmatpush1.msra.mxu0 %v27
  %402 = vmatprep.subr.mxu0 0.0
  %403 = vmatpush2.msra.mxu0 0.0
  %404 = vmatprep.subr.mxu0 0.0
  %405 = vmatpush2.msra.mxu0 0.0
  %406 = vmatprep.subr.mxu0 0.0
  %407 = vmatpush2.msra.mxu0 0.0
  %408 = vmatprep.subr.mxu0 0.0
  %409 = vmatpush2.msra.mxu0 0.0
  %410 = vmatprep.subr.mxu0 0.0
  %411 = vmatpush2.msra.mxu0 0.0
  %412 = vmatprep.subr.mxu0 0.0
  %413 = vmatpush2.msra.mxu0 0.0
  %414 = vmatprep.subr.mxu0 0.0
  %415 = vmatpush2.msra.mxu0 0.0
  %416 = vmatprep.subr.mxu0 0.0
  %417 = vmatpush2.msra.mxu0 0.0
  %418 = vmatprep.subr.mxu0 0.0
  %419 = vmatpush2.msra.mxu0 0.0
  %420 = vmatprep.subr.mxu0 0.0
  %421 = vmatpush2.msra.mxu0 0.0
  %422 = vmatprep.subr.mxu0 0.0
  %423 = vmatpush2.msra.mxu0 0.0
  %424 = vmatprep.subr.mxu0 0.0
  %425 = vmatpush2.msra.mxu0 0.0
  %426 = vmatprep.subr.mxu0 0.0
  %427 = vmatpush2.msra.mxu0 0.0
  %428 = vmatprep.subr.mxu0 0.0
  %429 = vmatpush2.msra.mxu0 0.0
  %430 = vmatprep.subr.mxu0 0.0
  %431 = vmatpush2.msra.mxu0 0.0
  %432 = vmatprep.subr.mxu0 0.0
  %433 = vmatpush2.msra.mxu0 0.0
  %434 = vmatprep.mubr.f32.mxu0 0.0
  %435 = vmatmul.mubr.f32.gmra.mxu0 %v368
  %v436 = vpop.f32.mrf.mxu0
  %v437 = vadd.f32 %v30, %v436
  %v438 = vpop.f32.mrf.mxu0
  %439 = vdwg.mxu0
  %v440 = vld [vmem:[%s3] sm:$0xff]
  %v441 = vld [vmem:[%s3 + $0x8] sm:$0xff]
  %v442 = vld [vmem:[%s3 + $0x10] sm:$0xff]
  %v443 = vld [vmem:[%s3 + $0x18] sm:$0xff]
  %v444 = vld [vmem:[%s4] sm:$0x1]
  %v446 = vlaneseq
  %v447 = vshrl.u32 %v446, 7
  %v448 = vsub.s32 0, %v447
  %v449 = vrot.slane %v444, %v448
  %v452 = vsel %vm35, %v364, 0
  %v455 = vsel %vm35, %v437, 0
  %457 = vmatprep.subr.mxu0 0.0
  %458 = vmatpush1.msra.mxu0 0.0
  %459 = vmatprep.subr.mxu0 0.0
  %460 = vmatpush1.msra.mxu0 0.0
  %461 = vmatprep.subr.mxu0 0.0
  %462 = vmatpush1.msra.mxu0 0.0
  %463 = vmatprep.subr.mxu0 0.0
  %464 = vmatpush1.msra.mxu0 0.0
  %465 = vmatprep.subr.mxu0 0.0
  %466 = vmatpush1.msra.mxu0 0.0
  %467 = vmatprep.subr.mxu0 0.0
  %468 = vmatpush1.msra.mxu0 0.0
  %469 = vmatprep.subr.mxu0 0.0
  %470 = vmatpush1.msra.mxu0 0.0
  %471 = vmatprep.subr.mxu0 0.0
  %472 = vmatpush1.msra.mxu0 0.0
  %473 = vmatprep.subr.mxu0 0.0
  %474 = vmatpush1.msra.mxu0 0.0
  %475 = vmatprep.subr.mxu0 0.0
  %476 = vmatpush1.msra.mxu0 0.0
  %477 = vmatprep.subr.mxu0 0.0
  %478 = vmatpush1.msra.mxu0 0.0
  %479 = vmatprep.subr.mxu0 0.0
  %480 = vmatpush1.msra.mxu0 0.0
  %481 = vmatprep.subr.mxu0 0.0
  %482 = vmatpush1.msra.mxu0 %v443
  %483 = vmatprep.subr.mxu0 0.0
  %484 = vmatpush1.msra.mxu0 %v442
  %485 = vmatprep.subr.mxu0 0.0
  %486 = vmatpush1.msra.mxu0 %v441
  %487 = vmatprep.subr.mxu0 0.0
  %488 = vmatpush1.msra.mxu0 %v440
  %489 = vmatprep.subr.mxu0 0.0
  %490 = vmatpush2.msra.mxu0 0.0
  %491 = vmatprep.subr.mxu0 0.0
  %492 = vmatpush2.msra.mxu0 0.0
  %493 = vmatprep.subr.mxu0 0.0
  %494 = vmatpush2.msra.mxu0 0.0
  %495 = vmatprep.subr.mxu0 0.0
  %496 = vmatpush2.msra.mxu0 0.0
  %497 = vmatprep.subr.mxu0 0.0
  %498 = vmatpush2.msra.mxu0 0.0
  %499 = vmatprep.subr.mxu0 0.0
  %500 = vmatpush2.msra.mxu0 0.0
  %501 = vmatprep.subr.mxu0 0.0
  %502 = vmatpush2.msra.mxu0 0.0
  %503 = vmatprep.subr.mxu0 0.0
  %504 = vmatpush2.msra.mxu0 0.0
  %505 = vmatprep.subr.mxu0 0.0
  %506 = vmatpush2.msra.mxu0 0.0
  %507 = vmatprep.subr.mxu0 0.0
  %508 = vmatpush2.msra.mxu0 0.0
  %509 = vmatprep.subr.mxu0 0.0
  %510 = vmatpush2.msra.mxu0 0.0
  %511 = vmatprep.subr.mxu0 0.0
  %512 = vmatpush2.msra.mxu0 0.0
  %513 = vmatprep.subr.mxu0 0.0
  %514 = vmatpush2.msra.mxu0 0.0
  %515 = vmatprep.subr.mxu0 0.0
  %516 = vmatpush2.msra.mxu0 0.0
  %517 = vmatprep.subr.mxu0 0.0
  %518 = vmatpush2.msra.mxu0 0.0
  %519 = vmatprep.subr.mxu0 0.0
  %520 = vmatpush2.msra.mxu0 0.0
  %521 = vmatprep.mubr.f32.mxu0 0.0
  %522 = vmatmul.mubr.f32.gmra.mxu0 %v452
  %v523 = vpop.f32.mrf.mxu0
  %v524 = vadd.f32 %v449, %v523
  %v525 = vpop.f32.mrf.mxu0
  %526 = vmatprep.mubr.f32.mxu0 0.0
  %527 = vmatmul.mubr.f32.gmra.mxu0 %v455
  %v528 = vpop.f32.mrf.mxu0
  %v529 = vadd.f32 %v449, %v528
  %v530 = vpop.f32.mrf.mxu0
  %531 = vdwg.mxu0
  %v532 = vmax.f32 %v524, 0.0
  %v533 = vmax.f32 %v529, 0.0
  %v534 = vld [vmem:[%s5] sm:$0xff]
  %v535 = vld [vmem:[%s5 + $0x8] sm:$0xff]
  %v536 = vld [vmem:[%s5 + $0x10] sm:$0xff]
  %v537 = vld [vmem:[%s5 + $0x18] sm:$0xff]
  %v538 = vld [vmem:[%s5 + $0x20] sm:$0xff]
  %v539 = vld [vmem:[%s5 + $0x28] sm:$0xff]
  %v540 = vld [vmem:[%s5 + $0x30] sm:$0xff]
  %v541 = vld [vmem:[%s5 + $0x38] sm:$0xff]
  %v542 = vld [vmem:[%s5 + $0x40] sm:$0xff]
  %v543 = vld [vmem:[%s5 + $0x48] sm:$0xff]
  %v544 = vld [vmem:[%s5 + $0x50] sm:$0xff]
  %v545 = vld [vmem:[%s5 + $0x58] sm:$0xff]
  %v546 = vld [vmem:[%s5 + $0x60] sm:$0xff]
  %v547 = vld [vmem:[%s5 + $0x68] sm:$0xff]
  %v548 = vld [vmem:[%s5 + $0x70] sm:$0xff]
  %v549 = vld [vmem:[%s5 + $0x78] sm:$0xff]
  %v550 = vld [vmem:[%s6] sm:$0x1]
  %v552 = vlaneseq
  %v553 = vshrl.u32 %v552, 7
  %v554 = vsub.s32 0, %v553
  %v555 = vrot.slane %v550, %v554
  %557 = vmatprep.subr.mxu0 0.0
  %558 = vmatpush1.msra.mxu0 %v549
  %559 = vmatprep.subr.mxu0 0.0
  %560 = vmatpush1.msra.mxu0 %v548
  %561 = vmatprep.subr.mxu0 0.0
  %562 = vmatpush1.msra.mxu0 %v547
  %563 = vmatprep.subr.mxu0 0.0
  %564 = vmatpush1.msra.mxu0 %v546
  %565 = vmatprep.subr.mxu0 0.0
  %566 = vmatpush1.msra.mxu0 %v545
  %567 = vmatprep.subr.mxu0 0.0
  %568 = vmatpush1.msra.mxu0 %v544
  %569 = vmatprep.subr.mxu0 0.0
  %570 = vmatpush1.msra.mxu0 %v543
  %571 = vmatprep.subr.mxu0 0.0
  %572 = vmatpush1.msra.mxu0 %v542
  %573 = vmatprep.subr.mxu0 0.0
  %574 = vmatpush1.msra.mxu0 %v541
  %575 = vmatprep.subr.mxu0 0.0
  %576 = vmatpush1.msra.mxu0 %v540
  %577 = vmatprep.subr.mxu0 0.0
  %578 = vmatpush1.msra.mxu0 %v539
  %579 = vmatprep.subr.mxu0 0.0
  %580 = vmatpush1.msra.mxu0 %v538
  %581 = vmatprep.subr.mxu0 0.0
  %582 = vmatpush1.msra.mxu0 %v537
  %583 = vmatprep.subr.mxu0 0.0
  %584 = vmatpush1.msra.mxu0 %v536
  %585 = vmatprep.subr.mxu0 0.0
  %586 = vmatpush1.msra.mxu0 %v535
  %587 = vmatprep.subr.mxu0 0.0
  %588 = vmatpush1.msra.mxu0 %v534
  %589 = vmatprep.subr.mxu0 0.0
  %590 = vmatpush2.msra.mxu0 0.0
  %591 = vmatprep.subr.mxu0 0.0
  %592 = vmatpush2.msra.mxu0 0.0
  %593 = vmatprep.subr.mxu0 0.0
  %594 = vmatpush2.msra.mxu0 0.0
  %595 = vmatprep.subr.mxu0 0.0
  %596 = vmatpush2.msra.mxu0 0.0
  %597 = vmatprep.subr.mxu0 0.0
  %598 = vmatpush2.msra.mxu0 0.0
  %599 = vmatprep.subr.mxu0 0.0
  %600 = vmatpush2.msra.mxu0 0.0
  %601 = vmatprep.subr.mxu0 0.0
  %602 = vmatpush2.msra.mxu0 0.0
  %603 = vmatprep.subr.mxu0 0.0
  %604 = vmatpush2.msra.mxu0 0.0
  %605 = vmatprep.subr.mxu0 0.0
  %606 = vmatpush2.msra.mxu0 0.0
  %607 = vmatprep.subr.mxu0 0.0
  %608 = vmatpush2.msra.mxu0 0.0
  %609 = vmatprep.subr.mxu0 0.0
  %610 = vmatpush2.msra.mxu0 0.0
  %611 = vmatprep.subr.mxu0 0.0
  %612 = vmatpush2.msra.mxu0 0.0
  %613 = vmatprep.subr.mxu0 0.0
  %614 = vmatpush2.msra.mxu0 0.0
  %615 = vmatprep.subr.mxu0 0.0
  %616 = vmatpush2.msra.mxu0 0.0
  %617 = vmatprep.subr.mxu0 0.0
  %618 = vmatpush2.msra.mxu0 0.0
  %619 = vmatprep.subr.mxu0 0.0
  %620 = vmatpush2.msra.mxu0 0.0
  %621 = vmatprep.mubr.f32.mxu0 0.0
  %622 = vmatmul.mubr.f32.gmra.mxu0 %v532
  %v623 = vpop.f32.mrf.mxu0
  %v624 = vadd.f32 %v555, %v623
  %v625 = vpop.f32.mrf.mxu0
  %626 = vmatprep.mubr.f32.mxu0 0.0
  %627 = vmatmul.mubr.f32.gmra.mxu0 %v533
  %v628 = vpop.f32.mrf.mxu0
  %v629 = vadd.f32 %v555, %v628
  %v630 = vpop.f32.mrf.mxu0
  %631 = vdwg.mxu0
  %632 = vst [vmem:[%s7] sm:$0xff] %v624
  %633 = vst [vmem:[%s7 + $0x8] sm:$0xff] %v629
  // Predicated region
  $region30: #{_forward_impl.1} parent=0 // pred_check
    _
  $region31: #{_forward_impl.1} parent=0 // pred_check_branch
    %635 = sbr.rel (0) target = $region33
  $region32: #{_forward_impl.1} parent=0 // pred_region
    _
  $region33: #{_forward_impl.1} parent=0 // pred_fallthru
    _
  // Predicated region
  $region34: #{_forward_impl.1} parent=0 // pred_check
    _
  $region35: #{_forward_impl.1} parent=0 // pred_check_branch
    %637 = sbr.rel (0) target = $region37
  $region36: #{_forward_impl.1} parent=0 // pred_region
    _
  $region37: #{_forward_impl.1} parent=0 // pred_fallthru
    _

</llo_original>
